<compile_context>
chip_gen: v7x
topology: tpu7x:2x2x1
jax: 0.10.0
libtpu: 0.0.40
codegen_flags: <defaults>
</compile_context>

<pallas_src>
import math

import jax
import jax.numpy as jnp
from jax.experimental import pallas as pl
from jax.experimental.pallas import tpu as pltpu


def _pe_add_kernel(x_ref, pe_ref, o_ref):
    # x_ref: (row_tile, L) tile; pe_ref: (1, L) pre-tiled PE row (period B*D along lanes).
    # Broadcast-add over the row (sublane) axis.  Dropout is identity in eval.
    o_ref[...] = x_ref[...] + pe_ref[...]


def _choose_lane_width(total, bd):
    """Pick a lane-dense row width L: multiple of 128 and of B*D, dividing `total`."""
    g = (bd * 128) // math.gcd(bd, 128)  # lcm(B*D, 128)
    if total % g != 0:
        return bd  # fallback: (S, B*D) slab — narrower stores but always correct
    cands = [g * k for k in range(1, 4096 // g + 1) if total % (g * k) == 0]
    if not cands:
        return g
    good = [L for L in cands if (total // L) >= 8]  # keep >= 8 rows (full sublanes)
    return max(good) if good else min(cands)


def learnable_positional_encoding(x, pe):
    """x: (S, B, D); pe: (max_len, 1, D) learned parameter. Returns (S, B, D) with
    out[s, b, :] = x[s, b, :] + pe[b, 0, :] (batch-indexed PE, as in the reference)."""
    S, B, D = x.shape
    BD = B * D
    total = S * BD
    itemsize = jnp.dtype(x.dtype).itemsize

    # ---- lane-dense relayout (wrapper-side, free layout plumbing) -------------------
    L = _choose_lane_width(total, BD)
    rows = total // L
    x2 = x.reshape(rows, L)
    # Flattened x element at column c needs pe_flat[c % BD]; since L % BD == 0 the
    # pattern is identical for every row, so one tiled (1, L) row suffices.
    pe_flat = pe[:B, 0, :].astype(x.dtype).reshape(BD)
    pe_row = jnp.tile(pe_flat, L // BD).reshape(1, L)

    # ---- row tiling: ~1 MiB blocks, single block when the whole problem is tiny -----
    row_bytes = L * itemsize
    sub_pack = max(8, 32 // itemsize)  # 8 (f32) / 16 (bf16) / 32 (int8, fp8)
    if rows * row_bytes <= (512 << 10):
        row_tile = rows  # one full block: no per-grid-step overhead
    else:
        row_tile = max(sub_pack, ((1 << 20) // row_bytes) // sub_pack * sub_pack)
        row_tile = min(row_tile, rows)
    nblocks = pl.cdiv(rows, row_tile)

    out2 = pl.pallas_call(
        _pe_add_kernel,
        out_shape=jax.ShapeDtypeStruct((rows, L), x.dtype),
        grid=(nblocks,),
        in_specs=[
            pl.BlockSpec((row_tile, L), lambda i: (i, 0)),
            pl.BlockSpec((1, L), lambda i: (0, 0)),
        ],
        out_specs=pl.BlockSpec((row_tile, L), lambda i: (i, 0)),
        input_output_aliases={0: 0},  # in-place add into x2's buffer
        compiler_params=pltpu.CompilerParams(
            dimension_semantics=(("parallel",) if nblocks > 1 else ("arbitrary",))
        ),
    )(x2, pe_row)
    return out2.reshape(S, B, D)
    # TODO(synk): training-mode dropout (p=0.1) would need pltpu.prng_seed /
    # prng_random_bits inside the kernel; the eval forward is the identity, so it is omitted.


if __name__ == "__main__":
    S, B, D, MAX_LEN = 16, 2, 32, 1024  # seq_len, batch, d_model, max_len
    key = jax.random.PRNGKey(0)
    kx, kp = jax.random.split(key)
    x = jax.random.normal(kx, (S, B, D), jnp.float32)
    # nn.init.uniform_(self.pe, -0.02, 0.02)
    pe = jax.random.uniform(kp, (MAX_LEN, 1, D), jnp.float32, minval=-0.02, maxval=0.02)

    # Pure-JAX reference mirroring the torch code exactly (transpose / add / transpose).
    # Computed BEFORE the donated call so x is still live here.
    ref = jax.block_until_ready((jnp.transpose(x, (1, 0, 2)) + pe[:B, :]).transpose(1, 0, 2))

    fwd = jax.jit(learnable_positional_encoding, donate_argnums=(0,))
    out = fwd(x, pe)
    jax.block_until_ready(out)

    assert out.shape == (S, B, D), out.shape
    assert bool(jnp.all(jnp.isfinite(out)))
    assert bool(jnp.allclose(out, ref, atol=1e-6, rtol=1e-6))
    print("KERNEL_OK")
</pallas_src>

<mosaic_0001>
module attributes {stable_mosaic.version = 11 : i64} {
  func.func @_pe_add_kernel(%arg0: i32, %arg1: memref<8x128xf32, #tpu.memory_space<vmem>>, %arg2: memref<1x128xf32, #tpu.memory_space<vmem>>, %arg3: memref<8x128xf32, #tpu.memory_space<vmem>>) attributes {dimension_semantics = [#tpu.dimension_semantics<arbitrary>], iteration_bounds = array<i64: 1>, scalar_prefetch = 0 : i64, scratch_operands = 0 : i64, tpu.core_type = #tpu.core_type<tc>, window_params = [{transform_indices = @transform_0, window_bounds = array<i64: 8, 128>}, {pipeline_mode = #tpu.pipeline_mode<synchronous>, transform_indices = @transform_1, window_bounds = array<i64: 1, 128>}, {transform_indices = @transform_2, window_bounds = array<i64: 8, 128>}]} {
    %c0 = arith.constant 0 : index
    %c0_0 = arith.constant 0 : index
    %0 = vector.load %arg1[%c0, %c0_0] : memref<8x128xf32, #tpu.memory_space<vmem>>, vector<8x128xf32>
    %c0_1 = arith.constant 0 : index
    %c0_2 = arith.constant 0 : index
    %1 = vector.load %arg2[%c0_1, %c0_2] : memref<1x128xf32, #tpu.memory_space<vmem>>, vector<1x128xf32>
    %2 = vector.broadcast %1 : vector<1x128xf32> to vector<8x128xf32>
    %3 = arith.addf %0, %2 : vector<8x128xf32>
    %c0_3 = arith.constant 0 : index
    %c0_4 = arith.constant 0 : index
    %4 = vector.load %arg3[%c0_3, %c0_4] : memref<8x128xf32, #tpu.memory_space<vmem>>, vector<8x128xf32>
    tpu.vector_store %arg3[%c0_3, %c0_4], %3 {strides = array<i32>} : memref<8x128xf32, #tpu.memory_space<vmem>>, vector<8x128xf32>,
    return
  }
  func.func @transform_0(%arg0: i32) -> (i32, i32) {
    %c0_i32 = arith.constant 0 : i32
    %c0_i32_0 = arith.constant 0 : i32
    return %arg0, %c0_i32 : i32, i32
  }
  func.func @transform_1(%arg0: i32) -> (i32, i32) {
    %c0_i32 = arith.constant 0 : i32
    %c0_i32_0 = arith.constant 0 : i32
    %c0_i32_1 = arith.constant 0 : i32
    return %c0_i32, %c0_i32_0 : i32, i32
  }
  func.func @transform_2(%arg0: i32) -> (i32, i32) {
    %c0_i32 = arith.constant 0 : i32
    %c0_i32_0 = arith.constant 0 : i32
    return %arg0, %c0_i32 : i32, i32
  }
}

</mosaic_0001>

<llo_original>
// kernel: tile.5
$region0: #{tile.5}
  %s0 = inlined_call_operand.vmem [shape: f32[2,1,32], index: 0, kind: input, shape index: {}]
  %s1 = inlined_call_operand.vmem [shape: f32[64], index: 1, kind: output, shape index: {}]
  $region1: #{tile.5} parent=0
    #allocation0 [shape = 'u8[4096]{0}', space=vmem, size = 0x1000, scoped, tag = 'scoped mem for output reshape']
    #allocation1 [shape = 'u8[4096]{0}', space=vmem, size = 0x1000, scoped, tag = 'scoped mem for input reshape']
    %s3 = sshllo.u32 0, 2
    %v4 = vld [vmem:[%s0] sm:%s3]
    %5 = vst [vmem:[#allocation1] sm:%s3] %v4
    %v6 = vld [vmem:[#allocation1] sm:$0x1]
    %vm7 = vcmask 261120
    %8 = vst.msk [vmem:[#allocation0] sm:$0x1] %vm7, %v6
    %s9 = scalar_lea.vmem [#allocation1], 1
    %v10 = vld [vmem:[%s9] sm:$0x1]
    %11 = vrot.lane.b32.xlu0 %v10, 32
    %v12 = vpop.permute.xlu0 %11
    %vm13 = vcmask 523520
    %14 = vst.msk [vmem:[#allocation0] sm:$0x1] %vm13, %v12
    %s16 = sshllo.u32 0, 1
    %v18 = vld [vmem:[#allocation0] sm:%s16]
    %s19 = sshllo.u32 0, 1
    %20 = vst [vmem:[%s1] sm:%s19] %v18

// kernel: tile.6
$region0: #{tile.6}
  #allocation0 [shape = 's32[1]{0}', space=sflag, size = 0x4, scoped, tag = 'scoped memory for tile.6']
  %s0 = inlined_call_operand.vmem [shape: f32[64], index: 0, kind: input, shape index: {}]
  %s1 = inlined_call_operand.vmem [shape: f32[2,64], index: 1, kind: output, shape index: {}]
  // Predicated region
  $region2: #{tile.6} parent=0 // pred_check
    _
  $region3: #{tile.6} parent=0 // pred_check_branch
    %3 = sbr.rel (0) target = $region5
  $region4: #{tile.6} parent=0 // pred_region
    _
  $region5: #{tile.6} parent=0 // pred_fallthru
    _
  %v4 = vld [vmem:[%s0] ss:$0 sm:$0xff]
  %5 = vst [vmem:[%s1] sm:$0x3] %v4

// kernel: tile.7
$region0: #{tile.7}
  %s0 = inlined_call_operand.vmem [shape: f32[2,64], index: 0, kind: input, shape index: {}]
  %s1 = inlined_call_operand.vmem [shape: f32[1,128], index: 1, kind: output, shape index: {}]
  $region1: #{tile.7} parent=0
    #allocation0 [shape = 'u8[4096]{0}', space=vmem, size = 0x1000, scoped, tag = 'scoped mem for output reshape']
    #allocation1 [shape = 'u8[4096]{0}', space=vmem, size = 0x1000, scoped, tag = 'scoped mem for input reshape']
    %s3 = sshllo.u32 0, 2
    %v4 = vld [vmem:[%s0] sm:%s3]
    %5 = vst [vmem:[#allocation1] sm:%s3] %v4
    %v6 = vld [vmem:[#allocation1] sm:$0x1]
    %vm7 = vcmask 523264
    %8 = vst.msk [vmem:[#allocation0] sm:$0x1] %vm7, %v6
    %s9 = scalar_lea.vmem [#allocation1], 1
    %v10 = vld [vmem:[%s9] sm:$0x1]
    %11 = vrot.lane.b32.xlu0 %v10, 64
    %v12 = vpop.permute.xlu0 %11
    %vm13 = vcmask 1048064
    %14 = vst.msk [vmem:[#allocation0] sm:$0x1] %vm13, %v12
    %s16 = sshllo.u32 0, 1
    %v18 = vld [vmem:[#allocation0] sm:%s16]
    %s19 = sshllo.u32 0, 1
    %20 = vst [vmem:[%s1] sm:%s19] %v18

// kernel: learnable_positional_encoding.1
$region0: #{learnable_positional_encoding.1}
  #allocation0 [shape = 'u32[]', space=smem, size = 0x4, offset = 0x4, fixed_abs, tag = 'smem constant byte address 0x4 - core index']
  #allocation1 [shape = 'u32[144,128]{1,0:T(1,128)}', space=vmem, size = 0x12000, scoped, tag = 'internal scratch']
  %s0 = inlined_call_operand.vmem [shape: f32[8,128], index: 0, kind: input, shape index: {}, may-alias: {0,2}]
  %s1 = inlined_call_operand.vmem [shape: f32[1,128], index: 1, kind: input, shape index: {}]
  %s2 = inlined_call_operand.vmem [shape: f32[8,128], index: 2, kind: output, shape index: {}, may-alias: {0,2}]
  %s3 = sld [smem:[#allocation0]]
  $region18: #{learnable_positional_encoding.1} parent=0
    _
  %s5 = ssub.s32 1, %s3
  %s6 = scalar_select 0, %s5, %s3
  // Predicated region
  $region2: #{learnable_positional_encoding.1} parent=0 // pred_check
    _
  $region3: #{learnable_positional_encoding.1} parent=0 // pred_check_branch
    %8 = sbr.rel (0) target = $region5
  $region4: #{learnable_positional_encoding.1} parent=0 // pred_region
    _
  $region5: #{learnable_positional_encoding.1} parent=0 // pred_fallthru
    _
  // Predicated region
  $region6: #{learnable_positional_encoding.1} parent=0 // pred_check
    _
  $region7: #{learnable_positional_encoding.1} parent=0 // pred_check_branch
    %10 = sbr.rel (0) target = $region9
  $region8: #{learnable_positional_encoding.1} parent=0 // pred_region
    _
  $region9: #{learnable_positional_encoding.1} parent=0 // pred_fallthru
    _
  %v11 = vld [vmem:[%s0] sm:$0xff]
  %v12 = vld [vmem:[%s1] sm:$0x1]
  %v14 = vlaneseq
  %v15 = vshrl.u32 %v14, 7
  %v16 = vsub.s32 0, %v15
  %v17 = vrot.slane %v12, %v16
  %v19 = vadd.f32 %v11, %v17
  %20 = vst [vmem:[%s2] sm:$0xff] %v19
  // Predicated region
  $region10: #{learnable_positional_encoding.1} parent=0 // pred_check
    _
  $region11: #{learnable_positional_encoding.1} parent=0 // pred_check_branch
    %22 = sbr.rel (0) target = $region13
  $region12: #{learnable_positional_encoding.1} parent=0 // pred_region
    _
  $region13: #{learnable_positional_encoding.1} parent=0 // pred_fallthru
    _
  // Predicated region
  $region14: #{learnable_positional_encoding.1} parent=0 // pred_check
    _
  $region15: #{learnable_positional_encoding.1} parent=0 // pred_check_branch
    %24 = sbr.rel (0) target = $region17
  $region16: #{learnable_positional_encoding.1} parent=0 // pred_region
    _
  $region17: #{learnable_positional_encoding.1} parent=0 // pred_fallthru
    _

</llo_original>
